<compile_context>
chip_gen: v5e
topology: v5e:2x2
jax: 0.10.0
libtpu: 0.0.40
codegen_flags: <defaults>
</compile_context>

<pallas_src>
import jax
import jax.numpy as jnp
from jax.experimental import pallas as pl
from jax.experimental.pallas import tpu as pltpu


def _round_up(n, m):
    return (n + m - 1) // m * m


def _cdiv(a, b):
    return (a + b - 1) // b


def _pad_to(a, shape):
    pads = tuple((0, t - s) for s, t in zip(a.shape, shape))
    if any(p for _, p in pads):
        return jnp.pad(a, pads)
    return a


def net2_kernel(x_ref, w0_ref, b0_ref, w1_ref, b1_ref, w2_ref, b2_ref, o_ref):
    cdt = w0_ref.dtype  # MXU operand dtype (bf16 or f32); biases/accum stay f32.

    # Input layer: Linear(F -> N) + ReLU   (Dropout == identity at inference)
    h = jnp.dot(x_ref[...], w0_ref[...], preferred_element_type=jnp.float32)
    h = jnp.maximum(h + b0_ref[...], 0.0)

    num_blocks = w1_ref.shape[0]
    # R is small & static -> full unroll is fine.
    # TODO(synk): switch to lax.fori_loop(..., unroll=True) with dynamic
    # w1_ref[r] indexing (and an R grid axis streaming weights) if R grows.
    for r in range(num_blocks):
        # ResidualBlock (in == out -> skip is Identity):
        #   h = relu( linear2( relu(linear1(h)) ) + h )
        t = jnp.dot(h.astype(cdt), w1_ref[r], preferred_element_type=jnp.float32)
        t = jnp.maximum(t + b1_ref[r], 0.0)
        t = jnp.dot(t.astype(cdt), w2_ref[r], preferred_element_type=jnp.float32)
        h = jnp.maximum(t + b2_ref[r] + h, 0.0)

    o_ref[...] = h.astype(o_ref.dtype)


def _pick_batch_tile(B, sublane, max_tile):
    """Largest sublane-aligned tile <= max_tile that minimizes tail padding,
    with >=2 grid steps when possible (v7x has 2 TensorCores)."""
    bq = _round_up(B, sublane)
    if bq <= max_tile:
        if bq >= 2 * sublane:
            return _round_up(_cdiv(bq, 2), sublane)   # 2 steps, minimal tail
        return bq
    n = _cdiv(bq, max_tile)
    return _round_up(_cdiv(bq, n), sublane)           # n steps, minimal tail


def net2_forward(x, params, *, batch_tile=None, compute_dtype=jnp.bfloat16,
                 out_dtype=jnp.float32):
    """Runs Net2 forward (eval mode). x: (B, F) f32. Returns (B, N) out_dtype."""
    w0, b0, w1, b1, w2, b2 = params
    B, F = x.shape
    N = w0.shape[1]
    R = w1.shape[0]

    LANE = 128
    N_pad = _round_up(N, LANE)

    cd_bytes = jnp.dtype(compute_dtype).itemsize
    sublane = max(8, 32 // cd_bytes)          # 8 for f32, 16 for bf16 packing
    if batch_tile is None:
        max_tile = 1024 if _round_up(B, sublane) >= 4096 else 512
        batch_tile = _pick_batch_tile(B, sublane, max_tile)
    assert batch_tile % sublane == 0, "batch_tile must be sublane-aligned"
    B_pad = _round_up(B, batch_tile)

    # Zero-pad activations/weights (inert under ReLU + residual adds).
    # x is cast to compute_dtype here (wrapper), not per-step in the kernel.
    xp = _pad_to(x, (B_pad, F)).astype(compute_dtype)
    w0p = _pad_to(w0, (F, N_pad)).astype(compute_dtype)
    b0p = _pad_to(b0, (1, N_pad)).astype(jnp.float32)
    w1p = _pad_to(w1, (R, N_pad, N_pad)).astype(compute_dtype)
    b1p = _pad_to(b1, (R, 1, N_pad)).astype(jnp.float32)
    w2p = _pad_to(w2, (R, N_pad, N_pad)).astype(compute_dtype)
    b2p = _pad_to(b2, (R, 1, N_pad)).astype(jnp.float32)

    # Resident weight/bias bytes (one copy).
    weight_bytes = ((F * N_pad + 2 * R * N_pad * N_pad) * cd_bytes
                    + (1 + 2 * R) * N_pad * 4)
    # Single-buffer the constant-index weights once double-buffering them would
    # start to matter against v7x's 64 MiB VMEM / 32 MiB scoped default.
    single_buffer_weights = (2 * weight_bytes) > (16 << 20)

    def _wspec(shape):
        imap = lambda i, _n=len(shape): (0,) * _n   # constant index: fetch once
        if single_buffer_weights:
            return pl.BlockSpec(shape, imap, pipeline_mode=pl.Buffered(1))
        return pl.BlockSpec(shape, imap)

    # Explicit scoped-VMEM budget (v5e default is only 16 MiB): double-buffered
    # streamed x/out tiles + weights + f32 h/t temporaries, with 2x headroom.
    out_bytes = jnp.dtype(out_dtype).itemsize
    io_tile_bytes = batch_tile * (F * cd_bytes + N_pad * out_bytes)
    act_bytes = 2 * batch_tile * N_pad * 4
    wbuf = 1 if single_buffer_weights else 2
    vmem_est = 2 * io_tile_bytes + wbuf * weight_bytes + act_bytes
    vmem_limit = int(min(max(2 * vmem_est + (8 << 20), 16 << 20), 64 << 20))

    grid = (B_pad // batch_tile,)
    kernel = pl.pallas_call(
        net2_kernel,
        out_shape=jax.ShapeDtypeStruct((B_pad, N_pad), out_dtype),
        grid_spec=pltpu.PrefetchScalarGridSpec(
            num_scalar_prefetch=0,
            grid=grid,
            in_specs=[
                pl.BlockSpec((batch_tile, F), lambda i: (i, 0)),   # x tile
                _wspec((F, N_pad)),                                # w0
                _wspec((1, N_pad)),                                # b0
                _wspec((R, N_pad, N_pad)),                         # w1
                _wspec((R, 1, N_pad)),                             # b1
                _wspec((R, N_pad, N_pad)),                         # w2
                _wspec((R, 1, N_pad)),                             # b2
            ],
            out_specs=pl.BlockSpec((batch_tile, N_pad), lambda i: (i, 0)),
        ),
        compiler_params=pltpu.CompilerParams(
            dimension_semantics=("parallel",),   # megacore-shardable batch axis
            vmem_limit_bytes=vmem_limit,
        ),
    )
    out = kernel(xp, w0p, b0p, w1p, b1p, w2p, b2p)
    return out[:B, :N]


def init_params(key, num_features, num_residual_blocks, num_neurons):
    """Deterministic synthetic parameter init (shapes match Net2.__init__)."""
    ks = jax.random.split(key, 6)
    scale = 0.1
    w0 = scale * jax.random.normal(ks[0], (num_features, num_neurons), jnp.float32)
    b0 = scale * jax.random.normal(ks[1], (1, num_neurons), jnp.float32)
    w1 = scale * jax.random.normal(
        ks[2], (num_residual_blocks, num_neurons, num_neurons), jnp.float32)
    b1 = scale * jax.random.normal(
        ks[3], (num_residual_blocks, 1, num_neurons), jnp.float32)
    w2 = scale * jax.random.normal(
        ks[4], (num_residual_blocks, num_neurons, num_neurons), jnp.float32)
    b2 = scale * jax.random.normal(
        ks[5], (num_residual_blocks, 1, num_neurons), jnp.float32)
    return (w0, b0, w1, b1, w2, b2)


def net2_reference(x, params):
    """Pure-JAX reference mirroring the PyTorch forward (eval mode)."""
    w0, b0, w1, b1, w2, b2 = params
    h = jnp.maximum(x @ w0 + b0, 0.0)
    for r in range(w1.shape[0]):
        t = jnp.maximum(h @ w1[r] + b1[r], 0.0)
        t = t @ w2[r] + b2[r] + h
        h = jnp.maximum(t, 0.0)
    return h


if __name__ == "__main__":
    num_features = 8
    num_residual_blocks = 3
    num_neurons = 32
    batch = 32

    key = jax.random.PRNGKey(0)
    kx, kp = jax.random.split(key)
    x = jax.random.normal(kx, (batch, num_features), jnp.float32)
    params = init_params(kp, num_features, num_residual_blocks, num_neurons)

    ref = net2_reference(x, params)

    # Default path: bf16 MXU operands, f32 accumulation + f32 bias/ReLU epilogue.
    out = jax.block_until_ready(net2_forward(x, params))
    assert out.shape == (batch, num_neurons)
    assert jnp.allclose(out, ref, atol=5e-2, rtol=5e-2), "bf16 mismatch vs reference"

    # f32 MXU path: exact-tolerance check.
    out_f32 = jax.block_until_ready(
        net2_forward(x, params, compute_dtype=jnp.float32))
    assert out_f32.shape == (batch, num_neurons)
    assert jnp.allclose(out_f32, ref, atol=1e-5, rtol=1e-5), "f32 mismatch vs reference"

    # Awkward batch size: exercises tail-aware tile selection (>=2 grid steps,
    # minimal zero-padded tail rows).
    x_odd = x[:20]
    out_odd = jax.block_until_ready(
        net2_forward(x_odd, params, compute_dtype=jnp.float32))
    assert out_odd.shape == (20, num_neurons)
    assert jnp.allclose(out_odd, net2_reference(x_odd, params),
                        atol=1e-5, rtol=1e-5), "odd-batch mismatch vs reference"

    print("KERNEL_OK")
</pallas_src>

<mosaic_0001>
module attributes {stable_mosaic.version = 11 : i64} {
  func.func @net2_kernel(%arg0: i32, %arg1: memref<16x8xbf16, #tpu.memory_space<vmem>>, %arg2: memref<8x128xbf16, #tpu.memory_space<vmem>>, %arg3: memref<1x128xf32, #tpu.memory_space<vmem>>, %arg4: memref<3x128x128xbf16, #tpu.memory_space<vmem>>, %arg5: memref<3x1x128xf32, #tpu.memory_space<vmem>>, %arg6: memref<3x128x128xbf16, #tpu.memory_space<vmem>>, %arg7: memref<3x1x128xf32, #tpu.memory_space<vmem>>, %arg8: memref<16x128xf32, #tpu.memory_space<vmem>>) attributes {dimension_semantics = [#tpu.dimension_semantics<parallel>], iteration_bounds = array<i64: 2>, scalar_prefetch = 0 : i64, scratch_operands = 0 : i64, tpu.core_type = #tpu.core_type<tc>, window_params = [{transform_indices = @transform_0, window_bounds = array<i64: 16, 8>}, {pipeline_mode = #tpu.pipeline_mode<synchronous>, transform_indices = @transform_1, window_bounds = array<i64: 8, 128>}, {pipeline_mode = #tpu.pipeline_mode<synchronous>, transform_indices = @transform_2, window_bounds = array<i64: 1, 128>}, {pipeline_mode = #tpu.pipeline_mode<synchronous>, transform_indices = @transform_3, window_bounds = array<i64: 3, 128, 128>}, {pipeline_mode = #tpu.pipeline_mode<synchronous>, transform_indices = @transform_4, window_bounds = array<i64: 3, 1, 128>}, {pipeline_mode = #tpu.pipeline_mode<synchronous>, transform_indices = @transform_5, window_bounds = array<i64: 3, 128, 128>}, {pipeline_mode = #tpu.pipeline_mode<synchronous>, transform_indices = @transform_6, window_bounds = array<i64: 3, 1, 128>}, {transform_indices = @transform_7, window_bounds = array<i64: 16, 128>}]} {
    %c0 = arith.constant 0 : index
    %c0_0 = arith.constant 0 : index
    %0 = vector.load %arg1[%c0, %c0_0] : memref<16x8xbf16, #tpu.memory_space<vmem>>, vector<16x8xbf16>
    %c0_1 = arith.constant 0 : index
    %c0_2 = arith.constant 0 : index
    %1 = vector.load %arg2[%c0_1, %c0_2] : memref<8x128xbf16, #tpu.memory_space<vmem>>, vector<8x128xbf16>
    %cst = arith.constant dense<0.000000e+00> : vector<16x128xf32>
    %2 = tpu.matmul %0, %1, %cst {dimension_numbers = #tpu.dot_dimension_numbers<[1], [0], [0], [1], [0, 0, 1, 1], [], []>} : vector<16x8xbf16>, vector<8x128xbf16>, vector<16x128xf32> -> vector<16x128xf32>
    %c0_3 = arith.constant 0 : index
    %c0_4 = arith.constant 0 : index
    %3 = vector.load %arg3[%c0_3, %c0_4] : memref<1x128xf32, #tpu.memory_space<vmem>>, vector<1x128xf32>
    %4 = vector.broadcast %3 : vector<1x128xf32> to vector<16x128xf32>
    %5 = arith.addf %2, %4 : vector<16x128xf32>
    %cst_5 = arith.constant 0.000000e+00 : f32
    %6 = vector.broadcast %cst_5 : f32 to vector<16x128xf32>
    %7 = arith.maximumf %5, %6 : vector<16x128xf32>
    %8 = arith.truncf %7 : vector<16x128xf32> to vector<16x128xbf16>
    %c0_6 = arith.constant 0 : index
    %c0_7 = arith.constant 0 : index
    %c0_8 = arith.constant 0 : index
    %9 = vector.load %arg4[%c0_6, %c0_7, %c0_8] : memref<3x128x128xbf16, #tpu.memory_space<vmem>>, vector<1x128x128xbf16>
    %10 = vector.shape_cast %9 : vector<1x128x128xbf16> to vector<128x128xbf16>
    %cst_9 = arith.constant dense<0.000000e+00> : vector<16x128xf32>
    %11 = tpu.matmul %8, %10, %cst_9 {dimension_numbers = #tpu.dot_dimension_numbers<[1], [0], [0], [1], [0, 0, 1, 1], [], []>} : vector<16x128xbf16>, vector<128x128xbf16>, vector<16x128xf32> -> vector<16x128xf32>
    %c0_10 = arith.constant 0 : index
    %c0_11 = arith.constant 0 : index
    %c0_12 = arith.constant 0 : index
    %12 = vector.load %arg5[%c0_10, %c0_11, %c0_12] : memref<3x1x128xf32, #tpu.memory_space<vmem>>, vector<1x1x128xf32>
    %13 = vector.shape_cast %12 : vector<1x1x128xf32> to vector<1x128xf32>
    %14 = vector.broadcast %13 : vector<1x128xf32> to vector<16x128xf32>
    %15 = arith.addf %11, %14 : vector<16x128xf32>
    %cst_13 = arith.constant 0.000000e+00 : f32
    %16 = vector.broadcast %cst_13 : f32 to vector<16x128xf32>
    %17 = arith.maximumf %15, %16 : vector<16x128xf32>
    %18 = arith.truncf %17 : vector<16x128xf32> to vector<16x128xbf16>
    %c0_14 = arith.constant 0 : index
    %c0_15 = arith.constant 0 : index
    %c0_16 = arith.constant 0 : index
    %19 = vector.load %arg6[%c0_14, %c0_15, %c0_16] : memref<3x128x128xbf16, #tpu.memory_space<vmem>>, vector<1x128x128xbf16>
    %20 = vector.shape_cast %19 : vector<1x128x128xbf16> to vector<128x128xbf16>
    %cst_17 = arith.constant dense<0.000000e+00> : vector<16x128xf32>
    %21 = tpu.matmul %18, %20, %cst_17 {dimension_numbers = #tpu.dot_dimension_numbers<[1], [0], [0], [1], [0, 0, 1, 1], [], []>} : vector<16x128xbf16>, vector<128x128xbf16>, vector<16x128xf32> -> vector<16x128xf32>
    %c0_18 = arith.constant 0 : index
    %c0_19 = arith.constant 0 : index
    %c0_20 = arith.constant 0 : index
    %22 = vector.load %arg7[%c0_18, %c0_19, %c0_20] : memref<3x1x128xf32, #tpu.memory_space<vmem>>, vector<1x1x128xf32>
    %23 = vector.shape_cast %22 : vector<1x1x128xf32> to vector<1x128xf32>
    %24 = vector.broadcast %23 : vector<1x128xf32> to vector<16x128xf32>
    %25 = arith.addf %21, %24 : vector<16x128xf32>
    %26 = arith.addf %25, %7 : vector<16x128xf32>
    %cst_21 = arith.constant 0.000000e+00 : f32
    %27 = vector.broadcast %cst_21 : f32 to vector<16x128xf32>
    %28 = arith.maximumf %26, %27 : vector<16x128xf32>
    %29 = arith.truncf %28 : vector<16x128xf32> to vector<16x128xbf16>
    %c1 = arith.constant 1 : index
    %c0_22 = arith.constant 0 : index
    %c0_23 = arith.constant 0 : index
    %30 = vector.load %arg4[%c1, %c0_22, %c0_23] : memref<3x128x128xbf16, #tpu.memory_space<vmem>>, vector<1x128x128xbf16>
    %31 = vector.shape_cast %30 : vector<1x128x128xbf16> to vector<128x128xbf16>
    %cst_24 = arith.constant dense<0.000000e+00> : vector<16x128xf32>
    %32 = tpu.matmul %29, %31, %cst_24 {dimension_numbers = #tpu.dot_dimension_numbers<[1], [0], [0], [1], [0, 0, 1, 1], [], []>} : vector<16x128xbf16>, vector<128x128xbf16>, vector<16x128xf32> -> vector<16x128xf32>
    %c1_25 = arith.constant 1 : index
    %c0_26 = arith.constant 0 : index
    %c0_27 = arith.constant 0 : index
    %33 = vector.load %arg5[%c1_25, %c0_26, %c0_27] : memref<3x1x128xf32, #tpu.memory_space<vmem>>, vector<1x1x128xf32>
    %34 = vector.shape_cast %33 : vector<1x1x128xf32> to vector<1x128xf32>
    %35 = vector.broadcast %34 : vector<1x128xf32> to vector<16x128xf32>
    %36 = arith.addf %32, %35 : vector<16x128xf32>
    %cst_28 = arith.constant 0.000000e+00 : f32
    %37 = vector.broadcast %cst_28 : f32 to vector<16x128xf32>
    %38 = arith.maximumf %36, %37 : vector<16x128xf32>
    %39 = arith.truncf %38 : vector<16x128xf32> to vector<16x128xbf16>
    %c1_29 = arith.constant 1 : index
    %c0_30 = arith.constant 0 : index
    %c0_31 = arith.constant 0 : index
    %40 = vector.load %arg6[%c1_29, %c0_30, %c0_31] : memref<3x128x128xbf16, #tpu.memory_space<vmem>>, vector<1x128x128xbf16>
    %41 = vector.shape_cast %40 : vector<1x128x128xbf16> to vector<128x128xbf16>
    %cst_32 = arith.constant dense<0.000000e+00> : vector<16x128xf32>
    %42 = tpu.matmul %39, %41, %cst_32 {dimension_numbers = #tpu.dot_dimension_numbers<[1], [0], [0], [1], [0, 0, 1, 1], [], []>} : vector<16x128xbf16>, vector<128x128xbf16>, vector<16x128xf32> -> vector<16x128xf32>
    %c1_33 = arith.constant 1 : index
    %c0_34 = arith.constant 0 : index
    %c0_35 = arith.constant 0 : index
    %43 = vector.load %arg7[%c1_33, %c0_34, %c0_35] : memref<3x1x128xf32, #tpu.memory_space<vmem>>, vector<1x1x128xf32>
    %44 = vector.shape_cast %43 : vector<1x1x128xf32> to vector<1x128xf32>
    %45 = vector.broadcast %44 : vector<1x128xf32> to vector<16x128xf32>
    %46 = arith.addf %42, %45 : vector<16x128xf32>
    %47 = arith.addf %46, %28 : vector<16x128xf32>
    %cst_36 = arith.constant 0.000000e+00 : f32
    %48 = vector.broadcast %cst_36 : f32 to vector<16x128xf32>
    %49 = arith.maximumf %47, %48 : vector<16x128xf32>
    %50 = arith.truncf %49 : vector<16x128xf32> to vector<16x128xbf16>
    %c2 = arith.constant 2 : index
    %c0_37 = arith.constant 0 : index
    %c0_38 = arith.constant 0 : index
    %51 = vector.load %arg4[%c2, %c0_37, %c0_38] : memref<3x128x128xbf16, #tpu.memory_space<vmem>>, vector<1x128x128xbf16>
    %52 = vector.shape_cast %51 : vector<1x128x128xbf16> to vector<128x128xbf16>
    %cst_39 = arith.constant dense<0.000000e+00> : vector<16x128xf32>
    %53 = tpu.matmul %50, %52, %cst_39 {dimension_numbers = #tpu.dot_dimension_numbers<[1], [0], [0], [1], [0, 0, 1, 1], [], []>} : vector<16x128xbf16>, vector<128x128xbf16>, vector<16x128xf32> -> vector<16x128xf32>
    %c2_40 = arith.constant 2 : index
    %c0_41 = arith.constant 0 : index
    %c0_42 = arith.constant 0 : index
    %54 = vector.load %arg5[%c2_40, %c0_41, %c0_42] : memref<3x1x128xf32, #tpu.memory_space<vmem>>, vector<1x1x128xf32>
    %55 = vector.shape_cast %54 : vector<1x1x128xf32> to vector<1x128xf32>
    %56 = vector.broadcast %55 : vector<1x128xf32> to vector<16x128xf32>
    %57 = arith.addf %53, %56 : vector<16x128xf32>
    %cst_43 = arith.constant 0.000000e+00 : f32
    %58 = vector.broadcast %cst_43 : f32 to vector<16x128xf32>
    %59 = arith.maximumf %57, %58 : vector<16x128xf32>
    %60 = arith.truncf %59 : vector<16x128xf32> to vector<16x128xbf16>
    %c2_44 = arith.constant 2 : index
    %c0_45 = arith.constant 0 : index
    %c0_46 = arith.constant 0 : index
    %61 = vector.load %arg6[%c2_44, %c0_45, %c0_46] : memref<3x128x128xbf16, #tpu.memory_space<vmem>>, vector<1x128x128xbf16>
    %62 = vector.shape_cast %61 : vector<1x128x128xbf16> to vector<128x128xbf16>
    %cst_47 = arith.constant dense<0.000000e+00> : vector<16x128xf32>
    %63 = tpu.matmul %60, %62, %cst_47 {dimension_numbers = #tpu.dot_dimension_numbers<[1], [0], [0], [1], [0, 0, 1, 1], [], []>} : vector<16x128xbf16>, vector<128x128xbf16>, vector<16x128xf32> -> vector<16x128xf32>
    %c2_48 = arith.constant 2 : index
    %c0_49 = arith.constant 0 : index
    %c0_50 = arith.constant 0 : index
    %64 = vector.load %arg7[%c2_48, %c0_49, %c0_50] : memref<3x1x128xf32, #tpu.memory_space<vmem>>, vector<1x1x128xf32>
    %65 = vector.shape_cast %64 : vector<1x1x128xf32> to vector<1x128xf32>
    %66 = vector.broadcast %65 : vector<1x128xf32> to vector<16x128xf32>
    %67 = arith.addf %63, %66 : vector<16x128xf32>
    %68 = arith.addf %67, %49 : vector<16x128xf32>
    %cst_51 = arith.constant 0.000000e+00 : f32
    %69 = vector.broadcast %cst_51 : f32 to vector<16x128xf32>
    %70 = arith.maximumf %68, %69 : vector<16x128xf32>
    %c0_52 = arith.constant 0 : index
    %c0_53 = arith.constant 0 : index
    %71 = vector.load %arg8[%c0_52, %c0_53] : memref<16x128xf32, #tpu.memory_space<vmem>>, vector<16x128xf32>
    tpu.vector_store %arg8[%c0_52, %c0_53], %70 {strides = array<i32>} : memref<16x128xf32, #tpu.memory_space<vmem>>, vector<16x128xf32>,
    return
  }
  func.func @transform_0(%arg0: i32) -> (i32, i32) {
    %c0_i32 = arith.constant 0 : i32
    %c0_i32_0 = arith.constant 0 : i32
    return %arg0, %c0_i32 : i32, i32
  }
  func.func @transform_1(%arg0: i32) -> (i32, i32) {
    %c0_i32 = arith.constant 0 : i32
    %c0_i32_0 = arith.constant 0 : i32
    %c0_i32_1 = arith.constant 0 : i32
    return %c0_i32, %c0_i32_0 : i32, i32
  }
  func.func @transform_2(%arg0: i32) -> (i32, i32) {
    %c0_i32 = arith.constant 0 : i32
    %c0_i32_0 = arith.constant 0 : i32
    %c0_i32_1 = arith.constant 0 : i32
    return %c0_i32, %c0_i32_0 : i32, i32
  }
  func.func @transform_3(%arg0: i32) -> (i32, i32, i32) {
    %c0_i32 = arith.constant 0 : i32
    %c0_i32_0 = arith.constant 0 : i32
    %c0_i32_1 = arith.constant 0 : i32
    %c0_i32_2 = arith.constant 0 : i32
    return %c0_i32, %c0_i32_0, %c0_i32_1 : i32, i32, i32
  }
  func.func @transform_4(%arg0: i32) -> (i32, i32, i32) {
    %c0_i32 = arith.constant 0 : i32
    %c0_i32_0 = arith.constant 0 : i32
    %c0_i32_1 = arith.constant 0 : i32
    %c0_i32_2 = arith.constant 0 : i32
    return %c0_i32, %c0_i32_0, %c0_i32_1 : i32, i32, i32
  }
  func.func @transform_5(%arg0: i32) -> (i32, i32, i32) {
    %c0_i32 = arith.constant 0 : i32
    %c0_i32_0 = arith.constant 0 : i32
    %c0_i32_1 = arith.constant 0 : i32
    %c0_i32_2 = arith.constant 0 : i32
    return %c0_i32, %c0_i32_0, %c0_i32_1 : i32, i32, i32
  }
  func.func @transform_6(%arg0: i32) -> (i32, i32, i32) {
    %c0_i32 = arith.constant 0 : i32
    %c0_i32_0 = arith.constant 0 : i32
    %c0_i32_1 = arith.constant 0 : i32
    %c0_i32_2 = arith.constant 0 : i32
    return %c0_i32, %c0_i32_0, %c0_i32_1 : i32, i32, i32
  }
  func.func @transform_7(%arg0: i32) -> (i32, i32) {
    %c0_i32 = arith.constant 0 : i32
    %c0_i32_0 = arith.constant 0 : i32
    return %arg0, %c0_i32 : i32, i32
  }
}

</mosaic_0001>

<llo_original>
// kernel: tpu_custom_call.1
$region0: #{tpu_custom_call.1}
  #allocation0 [shape = 'u32[]', space=smem, size = 0x4, offset = 0x4, fixed_abs, tag = 'smem constant byte address 0x4 - core index']
  #allocation1 [shape = 'u32[72,128]{1,0:T(1,128)}', space=vmem, size = 0x9000, scoped, tag = 'internal scratch']
  %s0 = inlined_call_operand.vmem [shape: bf16[32,8], index: 0, kind: input, shape index: {}]
  %s1 = inlined_call_operand.vmem [shape: bf16[8,128], index: 1, kind: input, shape index: {}]
  %s2 = inlined_call_operand.vmem [shape: f32[1,128], index: 2, kind: input, shape index: {}]
  %s3 = inlined_call_operand.hbm [shape: bf16[3,128,128], index: 3, kind: input, shape index: {}]
  %s4 = inlined_call_operand.vmem [shape: f32[3,1,128], index: 4, kind: input, shape index: {}]
  %s5 = inlined_call_operand.hbm [shape: bf16[3,128,128], index: 5, kind: input, shape index: {}]
  %s6 = inlined_call_operand.vmem [shape: f32[3,1,128], index: 6, kind: input, shape index: {}]
  %s7 = inlined_call_operand.hbm [shape: f32[32,128], index: 7, kind: output, shape index: {}]
  %s8 = sld [smem:[#allocation0]]
  $region69: #{tpu_custom_call.1} parent=0
    _
  %s10 = ssub.s32 1, %s8
  %s11 = scalar_select 0, %s10, %s8
  $region1: #{tpu_custom_call.1} parent=0
    #allocation2 [shape = 'u8[98304]{0}', space=vmem, size = 0x18000, scoped, tag = 'input window, operand 3, single buffered']
    #allocation3 [shape = 's32[2]{0}', space=sflag, size = 0x8, scoped, tag = 'scoped memory for tpu_custom_call.1']
    #allocation4 [shape = 's32[2]{0}', space=sflag, size = 0x8, scoped, tag = 'scoped memory for tpu_custom_call.1']
    #allocation5 [shape = 'u8[98304]{0}', space=vmem, size = 0x18000, scoped, tag = 'input window, operand 5, single buffered']
    #allocation6 [shape = 's32[1]{0}', space=sflag, size = 0x4, scoped, tag = 'scoped memory for tpu_custom_call.1']
    #allocation7 [shape = 'u8[16384]{0}', space=vmem, size = 0x4000, scoped, tag = 'output window, operand 0']
    %12 = vsyncpa [#allocation3], 0
    %13 = vsyncpa [#allocation6], 0
    %14 = vsyncpa [#allocation4], 0
    %s15 = scalar_lea.sflag [#allocation4], 1
    %16 = vsyncpa %s15, 0
    loop: start=0, step=1, limit=4
    $region2: #{tpu_custom_call.1} parent=1 // loop_pre_header
      _
    $region3: #{tpu_custom_call.1} parent=1 // loop_header
      %s18 = sphi 0, %s22
      %p19 = scmp.ge.s32.totalorder %s18, 4
      %s28 = sphi 0, %s30
      %s31 = sphi 0, %s28
      %s32 = sphi 0, %s31
      %s48 = sphi 0, %s32
      %s52 = sphi 0, %s52
      %s54 = sphi 0, %s52
      %s55 = sphi 0, %s54
      %s69 = sphi 0, %s55
      %s73 = sphi 0, %s73
      %s75 = sphi 0, %s73
      %s76 = sphi 0, %s75
      %s90 = sphi 0, %s76
      %s94 = sphi 0, %s94
      %s96 = sphi 0, %s94
      %s97 = sphi 0, %s96
      %s111 = sphi 0, %s97
      %s115 = sphi 0, %s115
      %s117 = sphi 0, %s115
      %s118 = sphi 0, %s117
      %s132 = sphi 0, %s118
      %s136 = sphi 0, %s136
      %s138 = sphi 0, %s136
      %s139 = sphi 0, %s138
      %s153 = sphi 0, %s139
      %s157 = sphi 0, %s157
      %s159 = sphi 0, %s157
      %s160 = sphi 0, %s159
      %s174 = sphi 0, %s160
      %s180 = sphi 0, %s182
      %s183 = sphi 0, %s180
      %s184 = sphi 0, %s183
      %s200 = sphi 0, %s184
    $region4: #{tpu_custom_call.1} parent=1 // loop_header_branch
      %21 = sbr.rel (%p19) target = $region8
    $region5: #{tpu_custom_call.1} parent=1 // loop_body
      %s23 = ssub.s32 %s18, 1
      %s24 = ssub.s32 %s18, 2
      %s25 = sadd.s32 %s18, 1
      %s26 = ssub.s32 %s18, %s25
      %p27 = scmp.eq.s32.totalorder %s26, 0
      %s29 = sadd.s32 %s28, 1
      %s30 = scalar_select %p27, %s28, %s29
      %p33 = pneg %p27
      %p34 = scmp.eq.s32.totalorder %s18, 1
      %p35 = por %p33, %p34
      %p36 = scmp.ne.s32.totalorder %s28, %s31
      %p37 = scmp.eq.s32.totalorder %s18, 0
      %p38 = por %p36, %p37
      %p39 = scmp.ne.s32.totalorder %s28, %s31
      %p40 = scmp.eq.s32.totalorder %s23, 1
      %p41 = por %p39, %p40
      %p42 = scmp.ne.s32.totalorder %s31, %s32
      %p43 = scmp.eq.s32.totalorder %s23, 0
      %p44 = por %p42, %p43
      %p45 = scmp.ne.s32.totalorder %s31, %s32
      %p46 = scmp.eq.s32.totalorder %s24, 1
      %p47 = por %p45, %p46
      %p49 = scmp.ne.s32.totalorder %s32, %s48
      %p50 = scmp.eq.s32.totalorder %s24, 0
      %p51 = por %p49, %p50
      %s53 = sadd.s32 %s52, 1
      %p56 = scmp.eq.s32.totalorder %s18, 1
      %p57 = scmp.ne.s32.totalorder %s52, %s54
      %p58 = scmp.eq.s32.totalorder %s18, 0
      %p59 = por %p57, %p58
      %p60 = scmp.ne.s32.totalorder %s52, %s54
      %p61 = scmp.eq.s32.totalorder %s23, 1
      %p62 = por %p60, %p61
      %p63 = scmp.ne.s32.totalorder %s54, %s55
      %p64 = scmp.eq.s32.totalorder %s23, 0
      %p65 = por %p63, %p64
      %p66 = scmp.ne.s32.totalorder %s54, %s55
      %p67 = scmp.eq.s32.totalorder %s24, 1
      %p68 = por %p66, %p67
      %p70 = scmp.ne.s32.totalorder %s55, %s69
      %p71 = scmp.eq.s32.totalorder %s24, 0
      %p72 = por %p70, %p71
      %s74 = sadd.s32 %s73, 1
      %p77 = scmp.eq.s32.totalorder %s18, 1
      %p78 = scmp.ne.s32.totalorder %s73, %s75
      %p79 = scmp.eq.s32.totalorder %s18, 0
      %p80 = por %p78, %p79
      %p81 = scmp.ne.s32.totalorder %s73, %s75
      %p82 = scmp.eq.s32.totalorder %s23, 1
      %p83 = por %p81, %p82
      %p84 = scmp.ne.s32.totalorder %s75, %s76
      %p85 = scmp.eq.s32.totalorder %s23, 0
      %p86 = por %p84, %p85
      %p87 = scmp.ne.s32.totalorder %s75, %s76
      %p88 = scmp.eq.s32.totalorder %s24, 1
      %p89 = por %p87, %p88
      %p91 = scmp.ne.s32.totalorder %s76, %s90
      %p92 = scmp.eq.s32.totalorder %s24, 0
      %p93 = por %p91, %p92
      %s95 = sadd.s32 %s94, 1
      %p98 = scmp.eq.s32.totalorder %s18, 1
      %p99 = scmp.ne.s32.totalorder %s94, %s96
      %p100 = scmp.eq.s32.totalorder %s18, 0
      %p101 = por %p99, %p100
      %p102 = scmp.ne.s32.totalorder %s94, %s96
      %p103 = scmp.eq.s32.totalorder %s23, 1
      %p104 = por %p102, %p103
      %p105 = scmp.ne.s32.totalorder %s96, %s97
      %p106 = scmp.eq.s32.totalorder %s23, 0
      %p107 = por %p105, %p106
      %p108 = scmp.ne.s32.totalorder %s96, %s97
      %p109 = scmp.eq.s32.totalorder %s24, 1
      %p110 = por %p108, %p109
      %p112 = scmp.ne.s32.totalorder %s97, %s111
      %p113 = scmp.eq.s32.totalorder %s24, 0
      %p114 = por %p112, %p113
      %s116 = sadd.s32 %s115, 1
      %p119 = scmp.eq.s32.totalorder %s18, 1
      %p120 = scmp.ne.s32.totalorder %s115, %s117
      %p121 = scmp.eq.s32.totalorder %s18, 0
      %p122 = por %p120, %p121
      %p123 = scmp.ne.s32.totalorder %s115, %s117
      %p124 = scmp.eq.s32.totalorder %s23, 1
      %p125 = por %p123, %p124
      %p126 = scmp.ne.s32.totalorder %s117, %s118
      %p127 = scmp.eq.s32.totalorder %s23, 0
      %p128 = por %p126, %p127
      %p129 = scmp.ne.s32.totalorder %s117, %s118
      %p130 = scmp.eq.s32.totalorder %s24, 1
      %p131 = por %p129, %p130
      %p133 = scmp.ne.s32.totalorder %s118, %s132
      %p134 = scmp.eq.s32.totalorder %s24, 0
      %p135 = por %p133, %p134
      %s137 = sadd.s32 %s136, 1
      %p140 = scmp.eq.s32.totalorder %s18, 1
      %p141 = scmp.ne.s32.totalorder %s136, %s138
      %p142 = scmp.eq.s32.totalorder %s18, 0
      %p143 = por %p141, %p142
      %p144 = scmp.ne.s32.totalorder %s136, %s138
      %p145 = scmp.eq.s32.totalorder %s23, 1
      %p146 = por %p144, %p145
      %p147 = scmp.ne.s32.totalorder %s138, %s139
      %p148 = scmp.eq.s32.totalorder %s23, 0
      %p149 = por %p147, %p148
      %p150 = scmp.ne.s32.totalorder %s138, %s139
      %p151 = scmp.eq.s32.totalorder %s24, 1
      %p152 = por %p150, %p151
      %p154 = scmp.ne.s32.totalorder %s139, %s153
      %p155 = scmp.eq.s32.totalorder %s24, 0
      %p156 = por %p154, %p155
      %s158 = sadd.s32 %s157, 1
      %p161 = scmp.eq.s32.totalorder %s18, 1
      %p162 = scmp.ne.s32.totalorder %s157, %s159
      %p163 = scmp.eq.s32.totalorder %s18, 0
      %p164 = por %p162, %p163
      %p165 = scmp.ne.s32.totalorder %s157, %s159
      %p166 = scmp.eq.s32.totalorder %s23, 1
      %p167 = por %p165, %p166
      %p168 = scmp.ne.s32.totalorder %s159, %s160
      %p169 = scmp.eq.s32.totalorder %s23, 0
      %p170 = por %p168, %p169
      %p171 = scmp.ne.s32.totalorder %s159, %s160
      %p172 = scmp.eq.s32.totalorder %s24, 1
      %p173 = por %p171, %p172
      %p175 = scmp.ne.s32.totalorder %s160, %s174
      %p176 = scmp.eq.s32.totalorder %s24, 0
      %p177 = por %p175, %p176
      %s178 = ssub.s32 %s18, %s25
      %p179 = scmp.eq.s32.totalorder %s178, 0
      %s181 = sadd.s32 %s180, 1
      %s182 = scalar_select %p179, %s180, %s181
      %p185 = pneg %p179
      %p186 = scmp.eq.s32.totalorder %s18, 1
      %p187 = por %p185, %p186
      %p188 = scmp.ne.s32.totalorder %s180, %s183
      %p189 = scmp.eq.s32.totalorder %s18, 0
      %p190 = por %p188, %p189
      %p191 = scmp.ne.s32.totalorder %s180, %s183
      %p192 = scmp.eq.s32.totalorder %s23, 1
      %p193 = por %p191, %p192
      %p194 = scmp.ne.s32.totalorder %s183, %s184
      %p195 = scmp.eq.s32.totalorder %s23, 0
      %p196 = por %p194, %p195
      %p197 = scmp.ne.s32.totalorder %s183, %s184
      %p198 = scmp.eq.s32.totalorder %s24, 1
      %p199 = por %p197, %p198
      %p201 = scmp.ne.s32.totalorder %s184, %s200
      %p202 = scmp.eq.s32.totalorder %s24, 0
      %p203 = por %p201, %p202
      %p204 = scmp.le.s32.totalorder 1, %s18
      %p205 = scmp.lt.s32.totalorder %s18, 3
      %p206 = pnand %p204, %p205
      %p207 = pneg %p206
      // Predicated region
      $region9: #{tpu_custom_call.1} parent=5 // pred_check
        _
      $region10: #{tpu_custom_call.1} parent=5 // pred_check_branch
        %209 = sbr.rel (%p206) target = $region12
      $region11: #{tpu_custom_call.1} parent=5 // pred_region
        %s210 = ssub.s32 %s18, 1
        // Predicated region
        $region13: #{tpu_custom_call.1} parent=11 // pred_check
          %p211 = pneg %p65
        $region14: #{tpu_custom_call.1} parent=11 // pred_check_branch
          %213 = sbr.rel (%p211) target = $region16
        $region15: #{tpu_custom_call.1} parent=11 // pred_region
          _
        $region16: #{tpu_custom_call.1} parent=11 // pred_fallthru
          _
        // Predicated region
        $region17: #{tpu_custom_call.1} parent=11 // pred_check
          %p214 = pneg %p86
        $region18: #{tpu_custom_call.1} parent=11 // pred_check_branch
          %216 = sbr.rel (%p214) target = $region20
        $region19: #{tpu_custom_call.1} parent=11 // pred_region
          _
        $region20: #{tpu_custom_call.1} parent=11 // pred_fallthru
          _
        // Predicated region
        $region21: #{tpu_custom_call.1} parent=11 // pred_check
          %p217 = pneg %p107
        $region22: #{tpu_custom_call.1} parent=11 // pred_check_branch
          %219 = sbr.rel (%p217) target = $region24
        $region23: #{tpu_custom_call.1} parent=11 // pred_region
          %221 = vsyncadd [#allocation3], 0
          %s222 = sshll.u32 %s3, 4
          %s223 = int_to_ptr.hbm [resolvable:$true] %s222
          %s224 = sshll.u32 [#allocation2], 4
          %s225 = int_to_ptr.vmem [resolvable:$true] %s224
          %230 = dma.hbm_to_vmem [thread:$0]  %s223, 3072, %s225, [#allocation3], 64, 64, 4
        $region24: #{tpu_custom_call.1} parent=11 // pred_fallthru
          _
        // Predicated region
        $region25: #{tpu_custom_call.1} parent=11 // pred_check
          %p231 = pneg %p128
        $region26: #{tpu_custom_call.1} parent=11 // pred_check_branch
          %233 = sbr.rel (%p231) target = $region28
        $region27: #{tpu_custom_call.1} parent=11 // pred_region
          _
        $region28: #{tpu_custom_call.1} parent=11 // pred_fallthru
          _
        // Predicated region
        $region29: #{tpu_custom_call.1} parent=11 // pred_check
          %p234 = pneg %p149
        $region30: #{tpu_custom_call.1} parent=11 // pred_check_branch
          %236 = sbr.rel (%p234) target = $region32
        $region31: #{tpu_custom_call.1} parent=11 // pred_region
          %238 = vsyncadd [#allocation6], 0
          %s239 = sshll.u32 %s5, 4
          %s240 = int_to_ptr.hbm [resolvable:$true] %s239
          %s241 = sshll.u32 [#allocation5], 4
          %s242 = int_to_ptr.vmem [resolvable:$true] %s241
          %247 = dma.hbm_to_vmem [thread:$0]  %s240, 3072, %s242, [#allocation6], 64, 64, 4
        $region32: #{tpu_custom_call.1} parent=11 // pred_fallthru
          _
        // Predicated region
        $region33: #{tpu_custom_call.1} parent=11 // pred_check
          %p248 = pneg %p170
        $region34: #{tpu_custom_call.1} parent=11 // pred_check_branch
          %250 = sbr.rel (%p248) target = $region36
        $region35: #{tpu_custom_call.1} parent=11 // pred_region
          _
        $region36: #{tpu_custom_call.1} parent=11 // pred_fallthru
          _
      $region12: #{tpu_custom_call.1} parent=5 // pred_fallthru
        _
      %p251 = scmp.lt.s32.totalorder %s18, 2
      // Predicated region
      $region37: #{tpu_custom_call.1} parent=5 // pred_check
        %p252 = pneg %p251
      $region38: #{tpu_custom_call.1} parent=5 // pred_check_branch
        %254 = sbr.rel (%p252) target = $region40
      $region39: #{tpu_custom_call.1} parent=5 // pred_region
        // Predicated region
        $region41: #{tpu_custom_call.1} parent=39 // pred_check
          %p255 = pneg %p38
        $region42: #{tpu_custom_call.1} parent=39 // pred_check_branch
          %257 = sbr.rel (%p255) target = $region44
        $region43: #{tpu_custom_call.1} parent=39 // pred_region
          %s258 = smul.u32 2, %s18
          %p259 = scmp.lt.s32.totalorder %s258, 3
          %s260 = scalar_select %p259, %s258, 3
          %s261 = smul.addr %s260, 4
          %s262 = scalar_lea.vmem %s0, %s261
          %s263 = smul.u32 2, %s18
        $region44: #{tpu_custom_call.1} parent=39 // pred_fallthru
          _
      $region40: #{tpu_custom_call.1} parent=5 // pred_fallthru
        _
      %p264 = scmp.le.s32.totalorder 1, %s18
      %p265 = scmp.lt.s32.totalorder %s18, 3
      %p266 = pnand %p264, %p265
      %p267 = pneg %p266
      // Predicated region
      $region45: #{tpu_custom_call.1} parent=5 // pred_check
        _
      $region46: #{tpu_custom_call.1} parent=5 // pred_check_branch
        %269 = sbr.rel (%p266) target = $region48
      $region47: #{tpu_custom_call.1} parent=5 // pred_region
        %s270 = ssub.s32 %s18, 1
        // Predicated region
        $region49: #{tpu_custom_call.1} parent=47 // pred_check
          %p271 = pneg %p107
        $region50: #{tpu_custom_call.1} parent=47 // pred_check_branch
          %273 = sbr.rel (%p271) target = $region52
        $region51: #{tpu_custom_call.1} parent=47 // pred_region
          %275 = dma.done [#allocation3], 3072
        $region52: #{tpu_custom_call.1} parent=47 // pred_fallthru
          _
        // Predicated region
        $region53: #{tpu_custom_call.1} parent=47 // pred_check
          %p276 = pneg %p149
        $region54: #{tpu_custom_call.1} parent=47 // pred_check_branch
          %278 = sbr.rel (%p276) target = $region56
        $region55: #{tpu_custom_call.1} parent=47 // pred_region
          %280 = dma.done [#allocation6], 3072
        $region56: #{tpu_custom_call.1} parent=47 // pred_fallthru
          _
        %s281 = smul.u32 2, %s23
        %p282 = scmp.lt.s32.totalorder %s281, 3
        %s283 = scalar_select %p282, %s281, 3
        %s284 = smul.addr %s283, 4
        %s285 = scalar_lea.vmem %s0, %s284
        %p286 = pneg %p44
        %p287 = pneg %p41
        %p288 = pneg %p65
        %p289 = pneg %p62
        %p290 = pneg %p86
        %p291 = pneg %p83
        %p292 = pneg %p107
        %p293 = pneg %p104
        %p294 = pneg %p128
        %p295 = pneg %p125
        %p296 = pneg %p149
        %p297 = pneg %p146
        %p298 = pneg %p170
        %p299 = pneg %p167
        %p300 = pneg %p196
        %p301 = pneg %p193
        %s302 = sand.u32 %s183, 1
        %s303 = scalar_lea.sflag [#allocation4], %s302
        %s304 = sand.u32 %s183, 1
        %s305 = smul.addr %s304, 16
        %s306 = scalar_lea.vmem [#allocation7], %s305
        %s307 = smul.u32 2, %s23
        %p308 = scmp.lt.s32.totalorder %s307, 3
        %s309 = scalar_select %p308, %s307, 3
        %s310 = smul.addr %s309, 4
        %s311 = scalar_lea.vmem %s0, %s310
        %s312 = smul.u32 2, %s23
        %s313 = smul.u32 2, %s23
        %v315 = vld [vmem:[%s311] sm:$0xf]
        %v316 = vld [vmem:[%s311 + $0x4] sm:$0xf]
        %v317 = vld [vmem:[%s1] sm:$0xf]
        %v318 = vld [vmem:[%s2] sm:$0x1]
        %v320 = vperm.slane %v318, 0
        %v324 = vunpack.c.l.b16 %v315
        %v325 = vunpack.c.l.b16 %v316
        %v326 = vpack.c.b16 %v325, %v324
        %vm327 = vcmask 64512
        %v329 = vsel %vm327, %v326, 0
        %vm331 = vcmask 1043456
        %v333 = vsel %vm331, %v317, 0
        %335 = vmatpush.bf16.msra.mxu0 0
        %336 = vmatpush.bf16.msra.mxu0 0
        %337 = vmatpush.bf16.msra.mxu0 0
        %338 = vmatpush.bf16.msra.mxu0 0
        %339 = vmatpush.bf16.msra.mxu0 0
        %340 = vmatpush.bf16.msra.mxu0 0
        %341 = vmatpush.bf16.msra.mxu0 0
        %342 = vmatpush.bf16.msra.mxu0 %v333
        %343 = vmatmul.bf16.gmra.mxu0 %v329
        %v344 = vpop.f32.mrf.mxu0
        %v345 = vadd.f32 %v320, %v344
        %v346 = vpop.f32.mrf.mxu0
        %v347 = vadd.f32 %v320, %v346
        %348 = vdwg.mxu0
        %v349 = vmax.f32 %v345, 0.0
        %v350 = vmax.f32 %v347, 0.0
        %v351 = vpack.c.bf16 %v350, %v349
        %v352 = vld [vmem:[#allocation2] sm:$0xf]
        %v353 = vld [vmem:[#allocation2 + $0x4] sm:$0xf]
        %v354 = vld [vmem:[#allocation2 + $0x8] sm:$0xf]
        %v355 = vld [vmem:[#allocation2 + $0xc] sm:$0xf]
        %v356 = vld [vmem:[#allocation2 + $0x10] sm:$0xf]
        %v357 = vld [vmem:[#allocation2 + $0x14] sm:$0xf]
        %v358 = vld [vmem:[#allocation2 + $0x18] sm:$0xf]
        %v359 = vld [vmem:[#allocation2 + $0x1c] sm:$0xf]
        %v360 = vld [vmem:[#allocation2 + $0x20] sm:$0xf]
        %v361 = vld [vmem:[#allocation2 + $0x24] sm:$0xf]
        %v362 = vld [vmem:[#allocation2 + $0x28] sm:$0xf]
        %v363 = vld [vmem:[#allocation2 + $0x2c] sm:$0xf]
        %v364 = vld [vmem:[#allocation2 + $0x30] sm:$0xf]
        %v365 = vld [vmem:[#allocation2 + $0x34] sm:$0xf]
        %v366 = vld [vmem:[#allocation2 + $0x38] sm:$0xf]
        %v367 = vld [vmem:[#allocation2 + $0x3c] sm:$0xf]
        %v368 = vld [vmem:[%s4] sm:$0x1]
        %v370 = vperm.slane %v368, 0
        %v388 = vunpack.c.l.b16 %v352
        %v389 = vunpack.c.l.b16 %v353
        %v390 = vunpack.c.l.b16 %v354
        %v391 = vunpack.c.l.b16 %v355
        %v392 = vunpack.c.l.b16 %v356
        %v393 = vunpack.c.l.b16 %v357
        %v394 = vunpack.c.l.b16 %v358
        %v395 = vunpack.c.l.b16 %v359
        %v396 = vunpack.c.l.b16 %v360
        %v397 = vunpack.c.l.b16 %v361
        %v398 = vunpack.c.l.b16 %v362
        %v399 = vunpack.c.l.b16 %v363
        %v400 = vunpack.c.l.b16 %v364
        %v401 = vunpack.c.l.b16 %v365
        %v402 = vunpack.c.l.b16 %v366
        %v403 = vunpack.c.l.b16 %v367
        %v404 = vpack.c.b16 %v389, %v388
        %v405 = vpack.c.b16 %v391, %v390
        %v406 = vpack.c.b16 %v393, %v392
        %v407 = vpack.c.b16 %v395, %v394
        %v408 = vpack.c.b16 %v397, %v396
        %v409 = vpack.c.b16 %v399, %v398
        %v410 = vpack.c.b16 %v401, %v400
        %v411 = vpack.c.b16 %v403, %v402
        %420 = vmatpush.bf16.msra.mxu0 %v411
        %421 = vmatpush.bf16.msra.mxu0 %v410
        %422 = vmatpush.bf16.msra.mxu0 %v409
        %423 = vmatpush.bf16.msra.mxu0 %v408
        %424 = vmatpush.bf16.msra.mxu0 %v407
        %425 = vmatpush.bf16.msra.mxu0 %v406
        %426 = vmatpush.bf16.msra.mxu0 %v405
        %427 = vmatpush.bf16.msra.mxu0 %v404
        %428 = vmatmul.bf16.gmra.mxu0 %v351
        %v429 = vpop.f32.mrf.mxu0
        %v430 = vadd.f32 %v370, %v429
        %v431 = vpop.f32.mrf.mxu0
        %v432 = vadd.f32 %v370, %v431
        %433 = vdwg.mxu0
        %v434 = vmax.f32 %v430, 0.0
        %v435 = vmax.f32 %v432, 0.0
        %v436 = vpack.c.bf16 %v435, %v434
        %v437 = vld [vmem:[#allocation5] sm:$0xf]
        %v438 = vld [vmem:[#allocation5 + $0x4] sm:$0xf]
        %v439 = vld [vmem:[#allocation5 + $0x8] sm:$0xf]
        %v440 = vld [vmem:[#allocation5 + $0xc] sm:$0xf]
        %v441 = vld [vmem:[#allocation5 + $0x10] sm:$0xf]
        %v442 = vld [vmem:[#allocation5 + $0x14] sm:$0xf]
        %v443 = vld [vmem:[#allocation5 + $0x18] sm:$0xf]
        %v444 = vld [vmem:[#allocation5 + $0x1c] sm:$0xf]
        %v445 = vld [vmem:[#allocation5 + $0x20] sm:$0xf]
        %v446 = vld [vmem:[#allocation5 + $0x24] sm:$0xf]
        %v447 = vld [vmem:[#allocation5 + $0x28] sm:$0xf]
        %v448 = vld [vmem:[#allocation5 + $0x2c] sm:$0xf]
        %v449 = vld [vmem:[#allocation5 + $0x30] sm:$0xf]
        %v450 = vld [vmem:[#allocation5 + $0x34] sm:$0xf]
        %v451 = vld [vmem:[#allocation5 + $0x38] sm:$0xf]
        %v452 = vld [vmem:[#allocation5 + $0x3c] sm:$0xf]
        %v453 = vld [vmem:[%s6] sm:$0x1]
        %v455 = vperm.slane %v453, 0
        %v473 = vunpack.c.l.b16 %v437
        %v474 = vunpack.c.l.b16 %v438
        %v475 = vunpack.c.l.b16 %v439
        %v476 = vunpack.c.l.b16 %v440
        %v477 = vunpack.c.l.b16 %v441
        %v478 = vunpack.c.l.b16 %v442
        %v479 = vunpack.c.l.b16 %v443
        %v480 = vunpack.c.l.b16 %v444
        %v481 = vunpack.c.l.b16 %v445
        %v482 = vunpack.c.l.b16 %v446
        %v483 = vunpack.c.l.b16 %v447
        %v484 = vunpack.c.l.b16 %v448
        %v485 = vunpack.c.l.b16 %v449
        %v486 = vunpack.c.l.b16 %v450
        %v487 = vunpack.c.l.b16 %v451
        %v488 = vunpack.c.l.b16 %v452
        %v489 = vpack.c.b16 %v474, %v473
        %v490 = vpack.c.b16 %v476, %v475
        %v491 = vpack.c.b16 %v478, %v477
        %v492 = vpack.c.b16 %v480, %v479
        %v493 = vpack.c.b16 %v482, %v481
        %v494 = vpack.c.b16 %v484, %v483
        %v495 = vpack.c.b16 %v486, %v485
        %v496 = vpack.c.b16 %v488, %v487
        %505 = vmatpush.bf16.msra.mxu0 %v496
        %506 = vmatpush.bf16.msra.mxu0 %v495
        %507 = vmatpush.bf16.msra.mxu0 %v494
        %508 = vmatpush.bf16.msra.mxu0 %v493
        %509 = vmatpush.bf16.msra.mxu0 %v492
        %510 = vmatpush.bf16.msra.mxu0 %v491
        %511 = vmatpush.bf16.msra.mxu0 %v490
        %512 = vmatpush.bf16.msra.mxu0 %v489
        %513 = vmatmul.bf16.gmra.mxu0 %v436
        %v514 = vpop.f32.mrf.mxu0
        %v515 = vadd.f32 %v455, %v514
        %v516 = vpop.f32.mrf.mxu0
        %v517 = vadd.f32 %v455, %v516
        %518 = vdwg.mxu0
        %v519 = vadd.f32 %v515, %v349
        %v520 = vadd.f32 %v517, %v350
        %v521 = vmax.f32 %v519, 0.0
        %v522 = vmax.f32 %v520, 0.0
        %v523 = vpack.c.bf16 %v522, %v521
        %s524 = scalar_lea.vmem [#allocation2], 64
        %v525 = vld [vmem:[%s524] sm:$0xf]
        %v526 = vld [vmem:[%s524 + $0x4] sm:$0xf]
        %v527 = vld [vmem:[%s524 + $0x8] sm:$0xf]
        %v528 = vld [vmem:[%s524 + $0xc] sm:$0xf]
        %v529 = vld [vmem:[%s524 + $0x10] sm:$0xf]
        %v530 = vld [vmem:[%s524 + $0x14] sm:$0xf]
        %v531 = vld [vmem:[%s524 + $0x18] sm:$0xf]
        %v532 = vld [vmem:[%s524 + $0x1c] sm:$0xf]
        %v533 = vld [vmem:[%s524 + $0x20] sm:$0xf]
        %v534 = vld [vmem:[%s524 + $0x24] sm:$0xf]
        %v535 = vld [vmem:[%s524 + $0x28] sm:$0xf]
        %v536 = vld [vmem:[%s524 + $0x2c] sm:$0xf]
        %v537 = vld [vmem:[%s524 + $0x30] sm:$0xf]
        %v538 = vld [vmem:[%s524 + $0x34] sm:$0xf]
        %v539 = vld [vmem:[%s524 + $0x38] sm:$0xf]
        %v540 = vld [vmem:[%s524 + $0x3c] sm:$0xf]
        %s541 = scalar_lea.vmem %s4, 1
        %v542 = vld [vmem:[%s541] sm:$0x1]
        %v544 = vperm.slane %v542, 0
        %v562 = vunpack.c.l.b16 %v525
        %v563 = vunpack.c.l.b16 %v526
        %v564 = vunpack.c.l.b16 %v527
        %v565 = vunpack.c.l.b16 %v528
        %v566 = vunpack.c.l.b16 %v529
        %v567 = vunpack.c.l.b16 %v530
        %v568 = vunpack.c.l.b16 %v531
        %v569 = vunpack.c.l.b16 %v532
        %v570 = vunpack.c.l.b16 %v533
        %v571 = vunpack.c.l.b16 %v534
        %v572 = vunpack.c.l.b16 %v535
        %v573 = vunpack.c.l.b16 %v536
        %v574 = vunpack.c.l.b16 %v537
        %v575 = vunpack.c.l.b16 %v538
        %v576 = vunpack.c.l.b16 %v539
        %v577 = vunpack.c.l.b16 %v540
        %v578 = vpack.c.b16 %v563, %v562
        %v579 = vpack.c.b16 %v565, %v564
        %v580 = vpack.c.b16 %v567, %v566
        %v581 = vpack.c.b16 %v569, %v568
        %v582 = vpack.c.b16 %v571, %v570
        %v583 = vpack.c.b16 %v573, %v572
        %v584 = vpack.c.b16 %v575, %v574
        %v585 = vpack.c.b16 %v577, %v576
        %594 = vmatpush.bf16.msra.mxu0 %v585
        %595 = vmatpush.bf16.msra.mxu0 %v584
        %596 = vmatpush.bf16.msra.mxu0 %v583
        %597 = vmatpush.bf16.msra.mxu0 %v582
        %598 = vmatpush.bf16.msra.mxu0 %v581
        %599 = vmatpush.bf16.msra.mxu0 %v580
        %600 = vmatpush.bf16.msra.mxu0 %v579
        %601 = vmatpush.bf16.msra.mxu0 %v578
        %602 = vmatmul.bf16.gmra.mxu0 %v523
        %v603 = vpop.f32.mrf.mxu0
        %v604 = vadd.f32 %v544, %v603
        %v605 = vpop.f32.mrf.mxu0
        %v606 = vadd.f32 %v544, %v605
        %607 = vdwg.mxu0
        %v608 = vmax.f32 %v604, 0.0
        %v609 = vmax.f32 %v606, 0.0
        %v610 = vpack.c.bf16 %v609, %v608
        %s611 = scalar_lea.vmem [#allocation5], 64
        %v612 = vld [vmem:[%s611] sm:$0xf]
        %v613 = vld [vmem:[%s611 + $0x4] sm:$0xf]
        %v614 = vld [vmem:[%s611 + $0x8] sm:$0xf]
        %v615 = vld [vmem:[%s611 + $0xc] sm:$0xf]
        %v616 = vld [vmem:[%s611 + $0x10] sm:$0xf]
        %v617 = vld [vmem:[%s611 + $0x14] sm:$0xf]
        %v618 = vld [vmem:[%s611 + $0x18] sm:$0xf]
        %v619 = vld [vmem:[%s611 + $0x1c] sm:$0xf]
        %v620 = vld [vmem:[%s611 + $0x20] sm:$0xf]
        %v621 = vld [vmem:[%s611 + $0x24] sm:$0xf]
        %v622 = vld [vmem:[%s611 + $0x28] sm:$0xf]
        %v623 = vld [vmem:[%s611 + $0x2c] sm:$0xf]
        %v624 = vld [vmem:[%s611 + $0x30] sm:$0xf]
        %v625 = vld [vmem:[%s611 + $0x34] sm:$0xf]
        %v626 = vld [vmem:[%s611 + $0x38] sm:$0xf]
        %v627 = vld [vmem:[%s611 + $0x3c] sm:$0xf]
        %s628 = scalar_lea.vmem %s6, 1
        %v629 = vld [vmem:[%s628] sm:$0x1]
        %v631 = vperm.slane %v629, 0
        %v649 = vunpack.c.l.b16 %v612
        %v650 = vunpack.c.l.b16 %v613
        %v651 = vunpack.c.l.b16 %v614
        %v652 = vunpack.c.l.b16 %v615
        %v653 = vunpack.c.l.b16 %v616
        %v654 = vunpack.c.l.b16 %v617
        %v655 = vunpack.c.l.b16 %v618
        %v656 = vunpack.c.l.b16 %v619
        %v657 = vunpack.c.l.b16 %v620
        %v658 = vunpack.c.l.b16 %v621
        %v659 = vunpack.c.l.b16 %v622
        %v660 = vunpack.c.l.b16 %v623
        %v661 = vunpack.c.l.b16 %v624
        %v662 = vunpack.c.l.b16 %v625
        %v663 = vunpack.c.l.b16 %v626
        %v664 = vunpack.c.l.b16 %v627
        %v665 = vpack.c.b16 %v650, %v649
        %v666 = vpack.c.b16 %v652, %v651
        %v667 = vpack.c.b16 %v654, %v653
        %v668 = vpack.c.b16 %v656, %v655
        %v669 = vpack.c.b16 %v658, %v657
        %v670 = vpack.c.b16 %v660, %v659
        %v671 = vpack.c.b16 %v662, %v661
        %v672 = vpack.c.b16 %v664, %v663
        %681 = vmatpush.bf16.msra.mxu0 %v672
        %682 = vmatpush.bf16.msra.mxu0 %v671
        %683 = vmatpush.bf16.msra.mxu0 %v670
        %684 = vmatpush.bf16.msra.mxu0 %v669
        %685 = vmatpush.bf16.msra.mxu0 %v668
        %686 = vmatpush.bf16.msra.mxu0 %v667
        %687 = vmatpush.bf16.msra.mxu0 %v666
        %688 = vmatpush.bf16.msra.mxu0 %v665
        %689 = vmatmul.bf16.gmra.mxu0 %v610
        %v690 = vpop.f32.mrf.mxu0
        %v691 = vadd.f32 %v631, %v690
        %v692 = vpop.f32.mrf.mxu0
        %v693 = vadd.f32 %v631, %v692
        %694 = vdwg.mxu0
        %v695 = vadd.f32 %v691, %v521
        %v696 = vadd.f32 %v693, %v522
        %v697 = vmax.f32 %v695, 0.0
        %v698 = vmax.f32 %v696, 0.0
        %v699 = vpack.c.bf16 %v698, %v697
        %s700 = scalar_lea.vmem [#allocation2], 128
        %v701 = vld [vmem:[%s700] sm:$0xf]
        %v702 = vld [vmem:[%s700 + $0x4] sm:$0xf]
        %v703 = vld [vmem:[%s700 + $0x8] sm:$0xf]
        %v704 = vld [vmem:[%s700 + $0xc] sm:$0xf]
        %v705 = vld [vmem:[%s700 + $0x10] sm:$0xf]
        %v706 = vld [vmem:[%s700 + $0x14] sm:$0xf]
        %v707 = vld [vmem:[%s700 + $0x18] sm:$0xf]
        %v708 = vld [vmem:[%s700 + $0x1c] sm:$0xf]
        %v709 = vld [vmem:[%s700 + $0x20] sm:$0xf]
        %v710 = vld [vmem:[%s700 + $0x24] sm:$0xf]
        %v711 = vld [vmem:[%s700 + $0x28] sm:$0xf]
        %v712 = vld [vmem:[%s700 + $0x2c] sm:$0xf]
        %v713 = vld [vmem:[%s700 + $0x30] sm:$0xf]
        %v714 = vld [vmem:[%s700 + $0x34] sm:$0xf]
        %v715 = vld [vmem:[%s700 + $0x38] sm:$0xf]
        %v716 = vld [vmem:[%s700 + $0x3c] sm:$0xf]
        %s717 = scalar_lea.vmem %s4, 2
        %v718 = vld [vmem:[%s717] sm:$0x1]
        %v720 = vperm.slane %v718, 0
        %v738 = vunpack.c.l.b16 %v701
        %v739 = vunpack.c.l.b16 %v702
        %v740 = vunpack.c.l.b16 %v703
        %v741 = vunpack.c.l.b16 %v704
        %v742 = vunpack.c.l.b16 %v705
        %v743 = vunpack.c.l.b16 %v706
        %v744 = vunpack.c.l.b16 %v707
        %v745 = vunpack.c.l.b16 %v708
        %v746 = vunpack.c.l.b16 %v709
        %v747 = vunpack.c.l.b16 %v710
        %v748 = vunpack.c.l.b16 %v711
        %v749 = vunpack.c.l.b16 %v712
        %v750 = vunpack.c.l.b16 %v713
        %v751 = vunpack.c.l.b16 %v714
        %v752 = vunpack.c.l.b16 %v715
        %v753 = vunpack.c.l.b16 %v716
        %v754 = vpack.c.b16 %v739, %v738
        %v755 = vpack.c.b16 %v741, %v740
        %v756 = vpack.c.b16 %v743, %v742
        %v757 = vpack.c.b16 %v745, %v744
        %v758 = vpack.c.b16 %v747, %v746
        %v759 = vpack.c.b16 %v749, %v748
        %v760 = vpack.c.b16 %v751, %v750
        %v761 = vpack.c.b16 %v753, %v752
        %770 = vmatpush.bf16.msra.mxu0 %v761
        %771 = vmatpush.bf16.msra.mxu0 %v760
        %772 = vmatpush.bf16.msra.mxu0 %v759
        %773 = vmatpush.bf16.msra.mxu0 %v758
        %774 = vmatpush.bf16.msra.mxu0 %v757
        %775 = vmatpush.bf16.msra.mxu0 %v756
        %776 = vmatpush.bf16.msra.mxu0 %v755
        %777 = vmatpush.bf16.msra.mxu0 %v754
        %778 = vmatmul.bf16.gmra.mxu0 %v699
        %v779 = vpop.f32.mrf.mxu0
        %v780 = vadd.f32 %v720, %v779
        %v781 = vpop.f32.mrf.mxu0
        %v782 = vadd.f32 %v720, %v781
        %783 = vdwg.mxu0
        %v784 = vmax.f32 %v780, 0.0
        %v785 = vmax.f32 %v782, 0.0
        %v786 = vpack.c.bf16 %v785, %v784
        %s787 = scalar_lea.vmem [#allocation5], 128
        %v788 = vld [vmem:[%s787] sm:$0xf]
        %v789 = vld [vmem:[%s787 + $0x4] sm:$0xf]
        %v790 = vld [vmem:[%s787 + $0x8] sm:$0xf]
        %v791 = vld [vmem:[%s787 + $0xc] sm:$0xf]
        %v792 = vld [vmem:[%s787 + $0x10] sm:$0xf]
        %v793 = vld [vmem:[%s787 + $0x14] sm:$0xf]
        %v794 = vld [vmem:[%s787 + $0x18] sm:$0xf]
        %v795 = vld [vmem:[%s787 + $0x1c] sm:$0xf]
        %v796 = vld [vmem:[%s787 + $0x20] sm:$0xf]
        %v797 = vld [vmem:[%s787 + $0x24] sm:$0xf]
        %v798 = vld [vmem:[%s787 + $0x28] sm:$0xf]
        %v799 = vld [vmem:[%s787 + $0x2c] sm:$0xf]
        %v800 = vld [vmem:[%s787 + $0x30] sm:$0xf]
        %v801 = vld [vmem:[%s787 + $0x34] sm:$0xf]
        %v802 = vld [vmem:[%s787 + $0x38] sm:$0xf]
        %v803 = vld [vmem:[%s787 + $0x3c] sm:$0xf]
        %s804 = scalar_lea.vmem %s6, 2
        %v805 = vld [vmem:[%s804] sm:$0x1]
        %v807 = vperm.slane %v805, 0
        %v825 = vunpack.c.l.b16 %v788
        %v826 = vunpack.c.l.b16 %v789
        %v827 = vunpack.c.l.b16 %v790
        %v828 = vunpack.c.l.b16 %v791
        %v829 = vunpack.c.l.b16 %v792
        %v830 = vunpack.c.l.b16 %v793
        %v831 = vunpack.c.l.b16 %v794
        %v832 = vunpack.c.l.b16 %v795
        %v833 = vunpack.c.l.b16 %v796
        %v834 = vunpack.c.l.b16 %v797
        %v835 = vunpack.c.l.b16 %v798
        %v836 = vunpack.c.l.b16 %v799
        %v837 = vunpack.c.l.b16 %v800
        %v838 = vunpack.c.l.b16 %v801
        %v839 = vunpack.c.l.b16 %v802
        %v840 = vunpack.c.l.b16 %v803
        %v841 = vpack.c.b16 %v826, %v825
        %v842 = vpack.c.b16 %v828, %v827
        %v843 = vpack.c.b16 %v830, %v829
        %v844 = vpack.c.b16 %v832, %v831
        %v845 = vpack.c.b16 %v834, %v833
        %v846 = vpack.c.b16 %v836, %v835
        %v847 = vpack.c.b16 %v838, %v837
        %v848 = vpack.c.b16 %v840, %v839
        %857 = vmatpush.bf16.msra.mxu0 %v848
        %858 = vmatpush.bf16.msra.mxu0 %v847
        %859 = vmatpush.bf16.msra.mxu0 %v846
        %860 = vmatpush.bf16.msra.mxu0 %v845
        %861 = vmatpush.bf16.msra.mxu0 %v844
        %862 = vmatpush.bf16.msra.mxu0 %v843
        %863 = vmatpush.bf16.msra.mxu0 %v842
        %864 = vmatpush.bf16.msra.mxu0 %v841
        %865 = vmatmul.bf16.gmra.mxu0 %v786
        %v866 = vpop.f32.mrf.mxu0
        %v867 = vadd.f32 %v807, %v866
        %v868 = vpop.f32.mrf.mxu0
        %v869 = vadd.f32 %v807, %v868
        %870 = vdwg.mxu0
        %v871 = vadd.f32 %v867, %v697
        %v872 = vadd.f32 %v869, %v698
        %v873 = vmax.f32 %v871, 0.0
        %v874 = vmax.f32 %v872, 0.0
        %875 = vst [vmem:[%s306] sm:$0xff] %v873
        %876 = vst [vmem:[%s306 + $0x8] sm:$0xff] %v874
        %s877 = sand.u32 %s183, 1
        %s878 = scalar_lea.sflag [#allocation4], %s877
        %s879 = sand.u32 %s183, 1
        %s880 = smul.addr %s879, 16
        %s881 = scalar_lea.vmem [#allocation7], %s880
        // Predicated region
        $region57: #{tpu_custom_call.1} parent=47 // pred_check
          %p882 = pneg %p193
        $region58: #{tpu_custom_call.1} parent=47 // pred_check_branch
          %884 = sbr.rel (%p882) target = $region60
        $region59: #{tpu_custom_call.1} parent=47 // pred_region
          %s885 = smul.u32 2, %s23
          %887 = vsyncadd %s878, 0
          %s888 = smul.addr %s885, 8
          %s889 = scalar_lea.hbm %s7, %s888
          %s890 = sshll.u32 %s881, 4
          %s891 = int_to_ptr.vmem [resolvable:$true] %s890
          %s892 = sshll.u32 %s889, 4
          %s893 = int_to_ptr.hbm [resolvable:$true] %s892
          %898 = dma.vmem_to_hbm [thread:$0]  %s891, 256, %s893, %s878, 128, 128, 8
        $region60: #{tpu_custom_call.1} parent=47 // pred_fallthru
          _
      $region48: #{tpu_custom_call.1} parent=5 // pred_fallthru
        _
      %p899 = scmp.le.s32.totalorder 2, %s18
      // Predicated region
      $region61: #{tpu_custom_call.1} parent=5 // pred_check
        %p900 = pneg %p899
      $region62: #{tpu_custom_call.1} parent=5 // pred_check_branch
        %902 = sbr.rel (%p900) target = $region64
      $region63: #{tpu_custom_call.1} parent=5 // pred_region
        %s903 = ssub.s32 %s18, 2
        // Predicated region
        $region65: #{tpu_custom_call.1} parent=63 // pred_check
          %p904 = pneg %p199
        $region66: #{tpu_custom_call.1} parent=63 // pred_check_branch
          %906 = sbr.rel (%p904) target = $region68
        $region67: #{tpu_custom_call.1} parent=63 // pred_region
          %s907 = sand.u32 %s184, 1
          %s908 = scalar_lea.sflag [#allocation4], %s907
          %s909 = sand.u32 %s184, 1
          %s910 = smul.addr %s909, 16
          %s911 = scalar_lea.vmem [#allocation7], %s910
          %913 = dma.done %s908, 256
        $region68: #{tpu_custom_call.1} parent=63 // pred_fallthru
          _
      $region64: #{tpu_custom_call.1} parent=5 // pred_fallthru
        _
    $region6: #{tpu_custom_call.1} parent=1 // loop_footer
      %s22 = sadd.s32 1, %s18
    $region7: #{tpu_custom_call.1} parent=1 // loop_footer_branch
      %17 = sbr.rel target = $region3
    $region8: #{tpu_custom_call.1} parent=1 // loop_exit
      _
    %914 = vsyncpa [#allocation3], 1
    %s915 = scalar_lea.sflag [#allocation3], 1
    %916 = vsyncpa %s915, 1
    %917 = vsyncpa [#allocation6], 1
    %918 = vsyncpa [#allocation4], 1
    %s919 = scalar_lea.sflag [#allocation4], 1
    %920 = vsyncpa %s919, 1

</llo_original>
